<compile_context>
chip_gen: v7x
topology: tpu7x:2x2x1
jax: 0.10.0
libtpu: 0.0.40
codegen_flags: <defaults>
</compile_context>

<pallas_src>
import functools

import jax
import jax.numpy as jnp
from jax import lax
from jax.experimental import pallas as pl
from jax.experimental.pallas import tpu as pltpu

_LANE = 128
_SUB = 16  # bf16 sublane quantum for the M (channel) axis


# ----------------------------------------------------------------------------
# tiling helpers (generation-gated via pltpu.get_tpu_info)
# ----------------------------------------------------------------------------
def _round_up(x, m):
    return (x + m - 1) // m * m


@functools.lru_cache()
def _tpu_vmem_bytes():
    try:
        return int(pltpu.get_tpu_info().vmem_capacity_bytes)
    except Exception:
        return 64 * 1024 * 1024  # conservative (v7x-sized) fallback


def _vmem_limit_bytes():
    return min(int(_tpu_vmem_bytes() * 0.7), 100 * 1024 * 1024)


def _divisor_tile(extent, cap, quantum):
    """(tile, padded_extent); tile is a multiple of `quantum`, prefers exact
    divisors of `extent` so the big B operand needs no pad+copy."""
    cap = max(cap, quantum)
    if extent >= quantum and extent % quantum == 0:
        t = min(cap, extent) // quantum * quantum
        while t >= quantum:
            if extent % t == 0:
                return t, extent
            t -= quantum
    t = min(cap, _round_up(extent, quantum))
    return t, _round_up(extent, t)


def _pick_tiles(mp, k, l, out_bytes):
    vmem = _tpu_vmem_bytes()
    big = vmem >= 100 * 1024 * 1024          # v5e/v6e: 128 MiB, v7x: 64 MiB
    tn_cap = 2048 if big else 1024
    tk_cap = 1024 if big else 512
    budget = int(vmem * 0.45)

    kq = _round_up(k, _SUB)
    if kq <= tk_cap:                         # single reduction step
        tk, kp = kq, kq
    else:                                    # tile K with a 128-quantum divisor
        kp = _round_up(k, _LANE)
        tk = _LANE
        t = min(tk_cap, kp) // _LANE * _LANE
        while t >= _LANE:
            if kp % t == 0:
                tk = t
                break
            t -= _LANE

    tn, lp = _divisor_tile(l, tn_cap, _LANE)

    def footprint(tk_, tn_):
        return (2 * mp * tk_ * 2 + 2 * tk_ * tn_ * 2
                + 2 * mp * tn_ * out_bytes + mp * tn_ * 4)

    while footprint(tk, tn) > budget and tn > _LANE:
        tn, lp = _divisor_tile(l, max(_LANE, tn // 2), _LANE)
    while (footprint(tk, tn) > budget and tk > _LANE
           and kp % _LANE == 0 and tk % _LANE == 0):
        nxt = tk
        t = (tk // 2) // _LANE * _LANE
        while t >= _LANE:
            if kp % t == 0:
                nxt = t
                break
            t -= _LANE
        if nxt == tk:
            break
        tk = nxt
    return tk, kp, tn, lp


# ----------------------------------------------------------------------------
# Fused tiled matmul kernel: bf16 (M,K)@(K,L) + bias -> activation (+ BN stats)
# ----------------------------------------------------------------------------
def _mm_body(a_ref, b_ref, bias_ref, o_ref, sum_ref, ssq_ref, acc_ref,
             act_out, with_stats):
    n = pl.program_id(0)
    k = pl.program_id(1)
    nk = pl.num_programs(1)

    @pl.when(k == 0)
    def _():
        acc_ref[...] = jnp.zeros_like(acc_ref)

    if with_stats:
        @pl.when(jnp.logical_and(n == 0, k == 0))
        def _():
            sum_ref[...] = jnp.zeros_like(sum_ref)
            ssq_ref[...] = jnp.zeros_like(ssq_ref)

    acc_ref[...] += jnp.dot(a_ref[...], b_ref[...],
                            preferred_element_type=jnp.float32)

    @pl.when(k == nk - 1)
    def _():
        acc = acc_ref[...]
        if with_stats:                       # BN batch statistics, fused (free)
            sum_ref[...] += jnp.sum(acc, axis=1, keepdims=True)
            ssq_ref[...] += jnp.sum(acc * acc, axis=1, keepdims=True)
        y = acc + bias_ref[...]
        if act_out == "leaky":
            y = jnp.where(y >= 0, y, 0.2 * y)
        elif act_out == "relu":
            y = jnp.maximum(y, 0.0)
        elif act_out == "tanh":
            y = jnp.tanh(y)
        o_ref[...] = y.astype(o_ref.dtype)


def _mm_kernel_nostats(a_ref, b_ref, bias_ref, o_ref, acc_ref, *, act_out):
    _mm_body(a_ref, b_ref, bias_ref, o_ref, None, None, acc_ref, act_out, False)


def _mm_kernel_stats(a_ref, b_ref, bias_ref, o_ref, sum_ref, ssq_ref, acc_ref,
                     *, act_out):
    _mm_body(a_ref, b_ref, bias_ref, o_ref, sum_ref, ssq_ref, acc_ref,
             act_out, True)


def matmul_fused(a, b, bias=None, act_out=None, with_stats=False,
                 out_dtype=jnp.bfloat16):
    """act_out(a @ b + bias); optionally also returns per-row sum / sum-sq of
    the pre-bias f32 accumulator (batch-norm statistics of the conv output)."""
    m, k = a.shape
    k2, l = b.shape
    assert k == k2
    mp = _round_up(max(m, 8), _SUB)
    out_bytes = jnp.dtype(out_dtype).itemsize
    tk, kp, tn, lp = _pick_tiles(mp, k, l, out_bytes)

    if mp == m and kp == k:
        a_p = a.astype(jnp.bfloat16)
    else:
        a_p = jnp.zeros((mp, kp), jnp.bfloat16).at[:m, :k].set(
            a.astype(jnp.bfloat16))
    if kp == k and lp == l and b.dtype == jnp.bfloat16:
        b_p = b                              # no pad/cast copy of the big operand
    else:
        b_p = jnp.zeros((kp, lp), jnp.bfloat16).at[:k, :l].set(
            b.astype(jnp.bfloat16))
    bias_vec = jnp.zeros((mp, 1), jnp.float32)
    if bias is not None:
        bias_vec = bias_vec.at[:m, 0].set(bias.astype(jnp.float32))

    n_n, n_k = lp // tn, kp // tk
    if with_stats:
        kernel = functools.partial(_mm_kernel_stats, act_out=act_out)
        out_shape = (jax.ShapeDtypeStruct((mp, lp), out_dtype),
                     jax.ShapeDtypeStruct((mp, 1), jnp.float32),
                     jax.ShapeDtypeStruct((mp, 1), jnp.float32))
        out_specs = (pl.BlockSpec((mp, tn), lambda n, k: (0, n)),
                     pl.BlockSpec((mp, 1), lambda n, k: (0, 0)),
                     pl.BlockSpec((mp, 1), lambda n, k: (0, 0)))
        semantics = ("arbitrary", "arbitrary")   # stats accumulate across lane tiles
    else:
        kernel = functools.partial(_mm_kernel_nostats, act_out=act_out)
        out_shape = jax.ShapeDtypeStruct((mp, lp), out_dtype)
        out_specs = pl.BlockSpec((mp, tn), lambda n, k: (0, n))
        semantics = ("parallel", "arbitrary")

    res = pl.pallas_call(
        kernel,
        out_shape=out_shape,
        grid_spec=pltpu.PrefetchScalarGridSpec(
            num_scalar_prefetch=0,
            grid=(n_n, n_k),
            in_specs=[pl.BlockSpec((mp, tk), lambda n, k: (0, k)),
                      pl.BlockSpec((tk, tn), lambda n, k: (k, n)),
                      pl.BlockSpec((mp, 1), lambda n, k: (0, 0))],
            out_specs=out_specs,
            scratch_shapes=[pltpu.VMEM((mp, tn), jnp.float32)]),
        compiler_params=pltpu.CompilerParams(
            dimension_semantics=semantics,
            vmem_limit_bytes=_vmem_limit_bytes()),
    )(a_p, b_p, bias_vec)

    if with_stats:
        out, s, ss = res
        return out[:m, :l], s[:m, 0], ss[:m, 0]
    return res[:m, :l], None, None


# ----------------------------------------------------------------------------
# Conv2d (k=4, s=2, p=1) and phase-fused ConvTranspose2d (k=4, s=2, p=1)
# ----------------------------------------------------------------------------
def conv_down(x, w, act=None, with_stats=False):
    """PyTorch Conv2d(k=4,s=2,p=1,bias=False) on channel-major (C, N, H, W).
    Epilogue activation and per-channel batch statistics are fused in-kernel."""
    c_in, n, h, w_ = x.shape
    c_out = w.shape[0]
    ho, wo = (h - 2) // 2 + 1, (w_ - 2) // 2 + 1
    xp = jnp.pad(x.astype(jnp.bfloat16), ((0, 0), (0, 0), (1, 1), (1, 1)))
    taps = [xp[:, :, ky:ky + 2 * ho - 1:2, kx:kx + 2 * wo - 1:2]
            for ky in range(4) for kx in range(4)]
    cols = jnp.stack(taps, axis=0).reshape(16 * c_in, n * ho * wo)   # bf16
    wm = jnp.transpose(w, (0, 2, 3, 1)).reshape(c_out, 16 * c_in)    # tiny re-layout
    out, s, ss = matmul_fused(wm, cols, act_out=act, with_stats=with_stats)
    return out.reshape(c_out, n, ho, wo), s, ss


# phase/tap -> ConvTranspose kernel index (-1 = no contribution, zero-filled)
_KY = ((3, 1, -1), (-1, 2, 0))


def _upconv_weight_matrix(wt):
    """wt: (C_in, C_out, 4, 4) -> (4*C_out, 9*C_in); rows = (phase_y, phase_x,
    c_out), cols = (tap_y, tap_x, c_in) over the shared 3x3 tap neighborhood."""
    c_in, c_out = wt.shape[0], wt.shape[1]
    wm = jnp.zeros((2, 2, c_out, 3, 3, c_in), wt.dtype)
    for p in range(2):
        for dh in range(3):
            ky = _KY[p][dh]
            if ky < 0:
                continue
            for q in range(2):
                for dw in range(3):
                    kx = _KY[q][dw]
                    if kx < 0:
                        continue
                    wm = wm.at[p, q, :, dh, dw, :].set(
                        jnp.transpose(wt[:, :, ky, kx]))
    return wm.reshape(4 * c_out, 9 * c_in)


def conv_up(parts, wt, bias=None, act=None, with_stats=False,
            out_dtype=jnp.bfloat16):
    """PyTorch [ReLU, ConvTranspose2d(k=4,s=2,p=1)] with all 4 sub-pixel output
    phases fused into ONE matmul.  `parts` is the (un-materialized) torch.cat
    input; the ReLU (uprelu) is applied once per element while taps are built."""
    n, h, w = parts[0].shape[1:]
    stacks = []
    for xpart in parts:
        xb = jnp.maximum(xpart, 0).astype(jnp.bfloat16)
        xq = jnp.pad(xb, ((0, 0), (0, 0), (1, 1), (1, 1)))
        stacks.append(jnp.stack(
            [xq[:, :, dh:dh + h, dw:dw + w] for dh in range(3) for dw in range(3)],
            axis=0))                                    # (9, C_i, N, H, W)
    c_total = sum(p_.shape[0] for p_ in parts)
    assert wt.shape[0] == c_total
    cols = jnp.concatenate(stacks, axis=1).reshape(9 * c_total, n * h * w)
    wm = _upconv_weight_matrix(wt)
    bias4 = None if bias is None else jnp.tile(bias, 4)
    out, s, ss = matmul_fused(wm, cols, bias=bias4, act_out=act,
                              with_stats=with_stats, out_dtype=out_dtype)
    return out, s, ss, (n, h, w)


def pixel_shuffle(u, c_out, n, h, w, scale=None, shift=None,
                  out_dtype=jnp.bfloat16):
    """(4*C_out, N*H*W) phase-major matmul output -> (C_out, N, 2H, 2W); an
    optional per-channel affine (BN normalize) is folded into this pass."""
    x = u[:4 * c_out].reshape(2, 2, c_out, n, h, w)
    if scale is not None:
        x = (x.astype(jnp.float32) * scale[None, None, :, None, None, None]
             + shift[None, None, :, None, None, None])
    y = jnp.transpose(x, (2, 3, 4, 0, 5, 1)).reshape(c_out, n, 2 * h, 2 * w)
    return y.astype(out_dtype)


# ----------------------------------------------------------------------------
# BatchNorm2d (training-mode batch stats) from fused conv statistics
# ----------------------------------------------------------------------------
def _bn_affine(s, ss, count, gamma, beta):
    mean = s / count
    # TODO(synk): E[x^2]-E[x]^2 in f32 can cancel for large-mean channels.
    var = jnp.maximum(ss / count - mean * mean, 0.0)
    scale = gamma * lax.rsqrt(var + 1e-5)
    shift = beta - mean * scale
    return scale, shift


def bn_apply(d, s, ss, gamma, beta, act=None):
    """Normalize a down-conv output (C, N, H, W) using the fused statistics;
    the trailing LeakyReLU (child's in-place downrelu) is fused here."""
    c, n, h, w = d.shape
    scale, shift = _bn_affine(s, ss, float(n * h * w), gamma, beta)
    y = (d.astype(jnp.float32) * scale[:, None, None, None]
         + shift[:, None, None, None])
    if act == "leaky":
        y = jnp.where(y >= 0, y, 0.2 * y)
    return y.astype(jnp.bfloat16)


def bn_pixel_shuffle(u, s, ss, gamma, beta, n, h, w):
    """Normalize a phase-fused up-conv output and interleave its phases."""
    c_out = gamma.shape[0]
    s_c = s[:4 * c_out].reshape(4, c_out).sum(0)
    ss_c = ss[:4 * c_out].reshape(4, c_out).sum(0)
    scale, shift = _bn_affine(s_c, ss_c, float(4 * n * h * w), gamma, beta)
    return pixel_shuffle(u, c_out, n, h, w, scale, shift, jnp.bfloat16)


# ----------------------------------------------------------------------------
# UnetBlock / Unet parameters + forward
# ----------------------------------------------------------------------------
def init_block(key, nf, ni, sub=None, input_c=None, dropout=False,
               innermost=False, outermost=False):
    if input_c is None:
        input_c = nf
    k1, k2, k3, k4, k5 = jax.random.split(key, 5)
    p = {"sub": sub, "dropout": dropout,
         "innermost": innermost, "outermost": outermost}
    p["down_w"] = 0.1 * jax.random.normal(k1, (ni, input_c, 4, 4), jnp.float32)
    if outermost:
        p["up_w"] = 0.1 * jax.random.normal(k2, (ni * 2, nf, 4, 4), jnp.float32)
        p["up_bias"] = 0.1 * jax.random.normal(k3, (nf,), jnp.float32)
    elif innermost:
        p["up_w"] = 0.1 * jax.random.normal(k2, (ni, nf, 4, 4), jnp.float32)
        p["up_gamma"] = 1.0 + 0.1 * jax.random.normal(k4, (nf,), jnp.float32)
        p["up_beta"] = 0.1 * jax.random.normal(k5, (nf,), jnp.float32)
    else:
        p["up_w"] = 0.1 * jax.random.normal(k2, (ni * 2, nf, 4, 4), jnp.float32)
        p["down_gamma"] = 1.0 + 0.1 * jax.random.normal(k3, (ni,), jnp.float32)
        p["down_beta"] = 0.1 * jax.random.normal(k4, (ni,), jnp.float32)
        p["up_gamma"] = 1.0 + 0.1 * jax.random.normal(k5, (nf,), jnp.float32)
        p["up_beta"] = jnp.zeros((nf,), jnp.float32)
    return p


def init_unet(key, input_c=1, output_c=2, n_down=8, num_filters=64):
    keys = iter(jax.random.split(key, n_down + 1))
    blk = init_block(next(keys), num_filters * 8, num_filters * 8, innermost=True)
    for _ in range(n_down - 5):
        blk = init_block(next(keys), num_filters * 8, num_filters * 8,
                         sub=blk, dropout=True)
    out_filters = num_filters * 8
    for _ in range(3):
        blk = init_block(next(keys), out_filters // 2, out_filters, sub=blk)
        out_filters //= 2
    return init_block(next(keys), output_c, out_filters, input_c=input_c,
                      sub=blk, outermost=True)


def block_forward(p, x):
    """x: (C, N, H, W), already carrying any in-place activation applied by this
    block's downrelu (fused into x's producer, matching torch in-place
    semantics).  Non-outermost blocks return the two parts of
    torch.cat([x, self.model(x)], 1) as a list (the cat is never materialized:
    the consumer's up-conv builds its tap matrix from the parts directly)."""
    if p["outermost"]:
        # [downconv, submodule, uprelu, upconv(+bias), Tanh]; the child's
        # in-place downrelu is fused into the downconv epilogue.
        d, _, _ = conv_down(x, p["down_w"], act="leaky")
        parts = block_forward(p["sub"], d)
        u, _, _, (n, h, w) = conv_up(parts, p["up_w"], bias=p["up_bias"],
                                     act="tanh", out_dtype=jnp.float32)
        return pixel_shuffle(u, p["up_w"].shape[1], n, h, w,
                             out_dtype=jnp.float32)

    if p["innermost"]:
        # [downrelu(already applied to x), downconv, uprelu, upconv, upnorm]
        d, _, _ = conv_down(x, p["down_w"], act="relu")
        u, s, ss, (n, h, w) = conv_up([d], p["up_w"], with_stats=True)
        hh = bn_pixel_shuffle(u, s, ss, p["up_gamma"], p["up_beta"], n, h, w)
        return [x, hh]

    # [downrelu(already applied), downconv, downnorm(+child leaky), submodule,
    #  uprelu(applied at tap build), upconv, upnorm]
    d, s, ss = conv_down(x, p["down_w"], with_stats=True)
    dn = bn_apply(d, s, ss, p["down_gamma"], p["down_beta"], act="leaky")
    parts = block_forward(p["sub"], dn)
    u, s2, ss2, (n, h, w) = conv_up(parts, p["up_w"], with_stats=True)
    hh = bn_pixel_shuffle(u, s2, ss2, p["up_gamma"], p["up_beta"], n, h, w)
    # TODO(synk): training-mode Dropout(0.5) not applied; the n_down=5 config
    # used below contains no dropout blocks.
    return [x, hh]


def unet_forward(params, x_nchw):
    x = jnp.transpose(x_nchw, (1, 0, 2, 3)).astype(jnp.bfloat16)  # NCHW -> CNHW
    y = block_forward(params, x)                                   # (C, N, H, W) f32
    return jnp.transpose(y, (1, 0, 2, 3))                          # CNHW -> NCHW


# ----------------------------------------------------------------------------
# Pure-JAX f32 reference of the exact torch graph (for numeric validation)
# ----------------------------------------------------------------------------
def _ref_conv_down(x, w):                           # x: (N, C, H, W)
    return lax.conv_general_dilated(x, w, (2, 2), [(1, 1), (1, 1)],
                                    dimension_numbers=("NCHW", "OIHW", "NCHW"))


def _ref_conv_up(x, wt, bias=None):
    w = jnp.transpose(jnp.flip(wt, (2, 3)), (1, 0, 2, 3))
    y = lax.conv_general_dilated(x, w, (1, 1), [(2, 2), (2, 2)],
                                 lhs_dilation=(2, 2),
                                 dimension_numbers=("NCHW", "OIHW", "NCHW"))
    if bias is not None:
        y = y + bias[None, :, None, None]
    return y


def _ref_bn(x, gamma, beta):
    mean = x.mean(axis=(0, 2, 3), keepdims=True)
    var = x.var(axis=(0, 2, 3), keepdims=True)
    return ((x - mean) * lax.rsqrt(var + 1e-5) * gamma[None, :, None, None]
            + beta[None, :, None, None])


def _ref_block(p, x):                               # x: (N, C, H, W) f32
    lrelu = lambda t: jnp.where(t >= 0, t, 0.2 * t)
    relu = lambda t: jnp.maximum(t, 0.0)
    if p["outermost"]:
        d = _ref_conv_down(x, p["down_w"])
        h = _ref_block(p["sub"], d)
        return jnp.tanh(_ref_conv_up(relu(h), p["up_w"], p["up_bias"]))
    if p["innermost"]:
        d = _ref_conv_down(lrelu(x), p["down_w"])
        u = _ref_conv_up(relu(d), p["up_w"])
        return jnp.concatenate(
            [lrelu(x), _ref_bn(u, p["up_gamma"], p["up_beta"])], axis=1)
    d = _ref_bn(_ref_conv_down(lrelu(x), p["down_w"]),
                p["down_gamma"], p["down_beta"])
    h = _ref_block(p["sub"], d)
    u = _ref_conv_up(relu(h), p["up_w"])
    return jnp.concatenate(
        [lrelu(x), _ref_bn(u, p["up_gamma"], p["up_beta"])], axis=1)


# ----------------------------------------------------------------------------
if __name__ == "__main__":
    key = jax.random.PRNGKey(0)
    kp, kx, k1, k2, k3, k4, k5 = jax.random.split(key, 7)

    # Unit check: Conv2d(k=4, s=2, p=1) against lax.conv_general_dilated.
    xc = jax.random.normal(k1, (3, 2, 8, 8), jnp.float32)             # (C, N, H, W)
    wc = 0.1 * jax.random.normal(k2, (5, 3, 4, 4), jnp.float32)
    got = conv_down(xc, wc)[0].astype(jnp.float32)
    ref = jnp.transpose(_ref_conv_down(jnp.transpose(xc, (1, 0, 2, 3)), wc),
                        (1, 0, 2, 3))
    assert float(jnp.max(jnp.abs(got - ref))) < 5e-2

    # Unit check: phase-fused ConvTranspose2d(k=4, s=2, p=1) (+bias).
    xt = jnp.abs(jax.random.normal(k3, (3, 2, 8, 8), jnp.float32))    # >=0: fused ReLU = id
    wt = 0.1 * jax.random.normal(k4, (3, 5, 4, 4), jnp.float32)
    bt = 0.1 * jax.random.normal(k5, (5,), jnp.float32)
    u, _, _, (n_, h_, w_) = conv_up([xt], wt, bias=bt, out_dtype=jnp.float32)
    got = pixel_shuffle(u, 5, n_, h_, w_, out_dtype=jnp.float32)
    ref = jnp.transpose(_ref_conv_up(jnp.transpose(xt, (1, 0, 2, 3)), wt, bt),
                        (1, 0, 2, 3))
    assert float(jnp.max(jnp.abs(got - ref))) < 5e-2

    # Unet(input_c=1, output_c=2, n_down=5, num_filters=8) on (2, 1, 32, 32).
    params = init_unet(kp, input_c=1, output_c=2, n_down=5, num_filters=8)
    x = jax.random.normal(kx, (2, 1, 32, 32), jnp.float32)
    fwd = jax.jit(functools.partial(unet_forward, params))
    out = jax.block_until_ready(fwd(x))
    assert out.shape == (2, 2, 32, 32), out.shape
    assert bool(jnp.all(jnp.isfinite(out)))

    # Loose end-to-end check against the pure-JAX f32 reference (bf16 activations
    # and bf16 MXU operands => finite tolerance; structural bugs give O(1) diffs).
    ref_out = jax.block_until_ready(jax.jit(functools.partial(_ref_block, params))(x))
    err = float(jnp.max(jnp.abs(out - ref_out)))
    assert err < 0.3, err

    print("KERNEL_OK")
</pallas_src>

<mosaic_0001>
module attributes {stable_mosaic.version = 11 : i64} {
  func.func @_mm_kernel_nostats(%arg0: i32, %arg1: i32, %arg2: memref<16x48xbf16, #tpu.memory_space<vmem>>, %arg3: memref<48x128xbf16, #tpu.memory_space<vmem>>, %arg4: memref<16x1xf32, #tpu.memory_space<vmem>>, %arg5: memref<16x128xbf16, #tpu.memory_space<vmem>>, %arg6: memref<16x128xf32, #tpu.memory_space<vmem>>) attributes {dimension_semantics = [#tpu.dimension_semantics<parallel>, #tpu.dimension_semantics<arbitrary>], iteration_bounds = array<i64: 1, 1>, scalar_prefetch = 0 : i64, scratch_operands = 1 : i64, tpu.core_type = #tpu.core_type<tc>, window_params = [{transform_indices = @transform_0, window_bounds = array<i64: 16, 48>}, {transform_indices = @transform_1, window_bounds = array<i64: 48, 128>}, {pipeline_mode = #tpu.pipeline_mode<synchronous>, transform_indices = @transform_2, window_bounds = array<i64: 16, 1>}, {transform_indices = @transform_3, window_bounds = array<i64: 16, 128>}]} {
    %c0_i32 = arith.constant 0 : i32
    %0 = arith.cmpi eq, %arg1, %c0_i32 : i32
    %1 = arith.extui %0 : i1 to i32
    %c0_i32_0 = arith.constant 0 : i32
    %2 = arith.cmpi ne, %1, %c0_i32_0 : i32
    scf.if %2 {
      %cst_10 = arith.constant 0.000000e+00 : f32
      %12 = vector.broadcast %cst_10 : f32 to vector<16x128xf32>
      %c0_11 = arith.constant 0 : index
      %c0_12 = arith.constant 0 : index
      %13 = vector.load %arg6[%c0_11, %c0_12] : memref<16x128xf32, #tpu.memory_space<vmem>>, vector<16x128xf32>
      tpu.vector_store %arg6[%c0_11, %c0_12], %12 {strides = array<i32>} : memref<16x128xf32, #tpu.memory_space<vmem>>, vector<16x128xf32>,
    } else {
    }
    %c0 = arith.constant 0 : index
    %c0_1 = arith.constant 0 : index
    %3 = vector.load %arg6[%c0, %c0_1] : memref<16x128xf32, #tpu.memory_space<vmem>>, vector<16x128xf32>
    %c0_2 = arith.constant 0 : index
    %c0_3 = arith.constant 0 : index
    %4 = vector.load %arg2[%c0_2, %c0_3] : memref<16x48xbf16, #tpu.memory_space<vmem>>, vector<16x48xbf16>
    %c0_4 = arith.constant 0 : index
    %c0_5 = arith.constant 0 : index
    %5 = vector.load %arg3[%c0_4, %c0_5] : memref<48x128xbf16, #tpu.memory_space<vmem>>, vector<48x128xbf16>
    %cst = arith.constant dense<0.000000e+00> : vector<16x128xf32>
    %6 = tpu.matmul %4, %5, %cst {dimension_numbers = #tpu.dot_dimension_numbers<[1], [0], [0], [1], [0, 0, 1, 1], [], []>} : vector<16x48xbf16>, vector<48x128xbf16>, vector<16x128xf32> -> vector<16x128xf32>
    %7 = arith.addf %3, %6 : vector<16x128xf32>
    %c0_6 = arith.constant 0 : index
    %c0_7 = arith.constant 0 : index
    %8 = vector.load %arg6[%c0_6, %c0_7] : memref<16x128xf32, #tpu.memory_space<vmem>>, vector<16x128xf32>
    tpu.vector_store %arg6[%c0_6, %c0_7], %7 {strides = array<i32>} : memref<16x128xf32, #tpu.memory_space<vmem>>, vector<16x128xf32>,
    %c0_i32_8 = arith.constant 0 : i32
    %9 = arith.cmpi eq, %arg1, %c0_i32_8 : i32
    %10 = arith.extui %9 : i1 to i32
    %c0_i32_9 = arith.constant 0 : i32
    %11 = arith.cmpi ne, %10, %c0_i32_9 : i32
    scf.if %11 {
      %c0_10 = arith.constant 0 : index
      %c0_11 = arith.constant 0 : index
      %12 = vector.load %arg6[%c0_10, %c0_11] : memref<16x128xf32, #tpu.memory_space<vmem>>, vector<16x128xf32>
      %c0_12 = arith.constant 0 : index
      %c0_13 = arith.constant 0 : index
      %13 = vector.load %arg4[%c0_12, %c0_13] : memref<16x1xf32, #tpu.memory_space<vmem>>, vector<16x1xf32>
      %14 = vector.broadcast %13 : vector<16x1xf32> to vector<16x128xf32>
      %15 = arith.addf %12, %14 : vector<16x128xf32>
      %16 = arith.truncf %15 : vector<16x128xf32> to vector<16x128xbf16>
      %c0_14 = arith.constant 0 : index
      %c0_15 = arith.constant 0 : index
      %17 = vector.load %arg5[%c0_14, %c0_15] : memref<16x128xbf16, #tpu.memory_space<vmem>>, vector<16x128xbf16>
      tpu.vector_store %arg5[%c0_14, %c0_15], %16 {strides = array<i32>} : memref<16x128xbf16, #tpu.memory_space<vmem>>, vector<16x128xbf16>,
    } else {
    }
    return
  }
  func.func @transform_0(%arg0: i32, %arg1: i32) -> (i32, i32) {
    %c0_i32 = arith.constant 0 : i32
    %c0_i32_0 = arith.constant 0 : i32
    return %c0_i32, %arg1 : i32, i32
  }
  func.func @transform_1(%arg0: i32, %arg1: i32) -> (i32, i32) {
    %c0_i32 = arith.constant 0 : i32
    return %arg1, %arg0 : i32, i32
  }
  func.func @transform_2(%arg0: i32, %arg1: i32) -> (i32, i32) {
    %c0_i32 = arith.constant 0 : i32
    %c0_i32_0 = arith.constant 0 : i32
    %c0_i32_1 = arith.constant 0 : i32
    return %c0_i32, %c0_i32_0 : i32, i32
  }
  func.func @transform_3(%arg0: i32, %arg1: i32) -> (i32, i32) {
    %c0_i32 = arith.constant 0 : i32
    %c0_i32_0 = arith.constant 0 : i32
    return %c0_i32, %arg0 : i32, i32
  }
}

</mosaic_0001>

<llo_original>
// kernel: tpu_custom_call.1
$region0: #{tpu_custom_call.1}
  #allocation0 [shape = 'u32[]', space=smem, size = 0x4, offset = 0x4, fixed_abs, tag = 'smem constant byte address 0x4 - core index']
  #allocation1 [shape = 'u32[144,128]{1,0:T(1,128)}', space=vmem, size = 0x12000, scoped, tag = 'internal scratch']
  #allocation2 [shape = 'f32[16,128]{1,0:T(8,128)}', space=vmem, size = 0x2000, scoped, tag = 'scratch operand']
  %s0 = inlined_call_operand.vmem [shape: bf16[16,48], index: 0, kind: input, shape index: {}]
  %s1 = inlined_call_operand.hbm [shape: bf16[48,128], index: 1, kind: input, shape index: {}]
  %s2 = inlined_call_operand.vmem [shape: f32[16,1], index: 2, kind: input, shape index: {}]
  %s3 = inlined_call_operand.hbm [shape: bf16[16,128], index: 3, kind: output, shape index: {}]
  %s4 = sld [smem:[#allocation0]]
  $region34: #{tpu_custom_call.1} parent=0
    _
  %s6 = ssub.s32 1, %s4
  %s7 = scalar_select 0, %s6, %s4
  $region1: #{tpu_custom_call.1} parent=0
    #allocation3 [shape = 'u8[12288]{0}', space=vmem, size = 0x3000, scoped, tag = 'input window, operand 1, single buffered']
    #allocation4 [shape = 's32[1]{0}', space=sflag, size = 0x4, scoped, tag = 'scoped memory for tpu_custom_call.1']
    #allocation5 [shape = 's32[1]{0}', space=sflag, size = 0x4, scoped, tag = 'scoped memory for tpu_custom_call.1']
    #allocation6 [shape = 'u8[4096]{0}', space=vmem, size = 0x1000, scoped, tag = 'output window, operand 0, single buffered']
    %8 = vsyncpa [#allocation4], 0
    %9 = vsyncpa [#allocation5], 0
    // Predicated region
    $region2: #{tpu_custom_call.1} parent=1 // pred_check
      _
    $region3: #{tpu_custom_call.1} parent=1 // pred_check_branch
      %11 = sbr.rel (0) target = $region5
    $region4: #{tpu_custom_call.1} parent=1 // pred_region
      _
    $region5: #{tpu_custom_call.1} parent=1 // pred_fallthru
      _
    // Predicated region
    $region6: #{tpu_custom_call.1} parent=1 // pred_check
      _
    $region7: #{tpu_custom_call.1} parent=1 // pred_check_branch
      %13 = sbr.rel (0) target = $region9
    $region8: #{tpu_custom_call.1} parent=1 // pred_region
      %s15 = ssub.s32 384, 384
      %16 = vsyncadd [#allocation4], %s15
      %s17 = sshll.u32 [#allocation3], 4
      %s18 = int_to_ptr.vmem [resolvable:$true] %s17
      %23 = dma.hbm_to_vmem [thread:$0]  %s1, 384, %s18, [#allocation4], 64, 64, 4
    $region9: #{tpu_custom_call.1} parent=1 // pred_fallthru
      _
    // Predicated region
    $region10: #{tpu_custom_call.1} parent=1 // pred_check
      _
    $region11: #{tpu_custom_call.1} parent=1 // pred_check_branch
      %25 = sbr.rel (0) target = $region13
    $region12: #{tpu_custom_call.1} parent=1 // pred_region
      _
    $region13: #{tpu_custom_call.1} parent=1 // pred_fallthru
      _
    // Predicated region
    $region14: #{tpu_custom_call.1} parent=1 // pred_check
      _
    $region15: #{tpu_custom_call.1} parent=1 // pred_check_branch
      %27 = sbr.rel (0) target = $region17
    $region16: #{tpu_custom_call.1} parent=1 // pred_region
      %28 = dma.done [#allocation4], 384
    $region17: #{tpu_custom_call.1} parent=1 // pred_fallthru
      _
    %p30 = scmp.eq.s32.totalorder 0, 0
    // Predicated region
    $region18: #{tpu_custom_call.1} parent=1 // pred_check
      %p31 = pneg %p30
    $region19: #{tpu_custom_call.1} parent=1 // pred_check_branch
      %33 = sbr.rel (%p31) target = $region21
    $region20: #{tpu_custom_call.1} parent=1 // pred_region
      %34 = vst [vmem:[#allocation2] sm:$0xff] 0.0
      %35 = vst [vmem:[#allocation2 + $0x8] sm:$0xff] 0.0
    $region21: #{tpu_custom_call.1} parent=1 // pred_fallthru
      _
    %v36 = vld [vmem:[#allocation2] sm:$0xff]
    %v37 = vld [vmem:[#allocation2 + $0x8] sm:$0xff]
    %v38 = vld [vmem:[%s0] sm:$0xf]
    %v39 = vld [vmem:[%s0 + $0x4] sm:$0xf]
    %v40 = vld [vmem:[#allocation3] sm:$0xf]
    %v41 = vld [vmem:[#allocation3 + $0x4] sm:$0xf]
    %v42 = vld [vmem:[#allocation3 + $0x8] sm:$0xf]
    %v43 = vld [vmem:[#allocation3 + $0xc] sm:$0xf]
    %v44 = vld [vmem:[#allocation3 + $0x10] sm:$0xf]
    %v45 = vld [vmem:[#allocation3 + $0x14] sm:$0xf]
    %v48 = vunpack.c.l.b16 %v38
    %v49 = vunpack.c.l.b16 %v39
    %v50 = vpack.c.b16 %v49, %v48
    %v57 = vunpack.c.l.b16 %v40
    %v58 = vunpack.c.l.b16 %v41
    %v59 = vunpack.c.l.b16 %v42
    %v60 = vunpack.c.l.b16 %v43
    %v61 = vunpack.c.l.b16 %v44
    %v62 = vunpack.c.l.b16 %v45
    %v63 = vpack.c.b16 %v58, %v57
    %v64 = vpack.c.b16 %v60, %v59
    %v65 = vpack.c.b16 %v62, %v61
    %vm69 = vcmask 392192
    %v71 = vsel %vm69, %v50, 0
    %73 = vmatprep.subr.bf16.mxu0 0
    %74 = vmatpush1.bf16.msra.mxu0 %v63
    %75 = vmatprep.subr.bf16.mxu0 0
    %76 = vmatpush1.bf16.msra.mxu0 %v64
    %77 = vmatprep.subr.bf16.mxu0 0
    %78 = vmatpush1.bf16.msra.mxu0 %v65
    %79 = vmatprep.subr.bf16.mxu0 0
    %80 = vmatpush1.bf16.msra.mxu0 0
    %81 = vmatprep.subr.bf16.mxu0 0
    %82 = vmatpush1.bf16.msra.mxu0 0
    %83 = vmatprep.subr.bf16.mxu0 0
    %84 = vmatpush1.bf16.msra.mxu0 0
    %85 = vmatprep.subr.bf16.mxu0 0
    %86 = vmatpush1.bf16.msra.mxu0 0
    %87 = vmatprep.subr.bf16.mxu0 0
    %88 = vmatpush1.bf16.msra.mxu0 0
    %89 = vmatprep.subr.bf16.mxu0 0
    %90 = vmatpush1.bf16.msra.mxu0 0
    %91 = vmatprep.subr.bf16.mxu0 0
    %92 = vmatpush1.bf16.msra.mxu0 0
    %93 = vmatprep.subr.bf16.mxu0 0
    %94 = vmatpush1.bf16.msra.mxu0 0
    %95 = vmatprep.subr.bf16.mxu0 0
    %96 = vmatpush1.bf16.msra.mxu0 0
    %97 = vmatprep.subr.bf16.mxu0 0
    %98 = vmatpush1.bf16.msra.mxu0 0
    %99 = vmatprep.subr.bf16.mxu0 0
    %100 = vmatpush1.bf16.msra.mxu0 0
    %101 = vmatprep.subr.bf16.mxu0 0
    %102 = vmatpush1.bf16.msra.mxu0 0
    %103 = vmatprep.subr.bf16.mxu0 0
    %104 = vmatpush1.bf16.msra.mxu0 0
    %105 = vmatprep.mubr.bf16.mxu0 0
    %106 = vmatmul.mubr.bf16.gmra.mrb[0].mxu0 %v71
    %v107 = vpop.f32.mrb[0].mxu0
    %v108 = vadd.f32 0.0, %v107
    %v109 = vpop.f32.mrb[0].mxu0
    %v110 = vpop.f32.mrb[0].mxu0
    %v111 = vadd.f32 0.0, %v110
    %v112 = vpop.f32.mrb[0].mxu0
    %113 = vdwg.mxu0
    %v114 = vadd.f32 %v36, %v108
    %v115 = vadd.f32 %v37, %v111
    %116 = vst [vmem:[#allocation2] sm:$0xff] %v114
    %117 = vst [vmem:[#allocation2 + $0x8] sm:$0xff] %v115
    // Predicated region
    $region22: #{tpu_custom_call.1} parent=1 // pred_check
      %p118 = pneg %p30
    $region23: #{tpu_custom_call.1} parent=1 // pred_check_branch
      %120 = sbr.rel (%p118) target = $region25
    $region24: #{tpu_custom_call.1} parent=1 // pred_region
      %v121 = vld [vmem:[#allocation2] sm:$0xff]
      %v122 = vld [vmem:[#allocation2 + $0x8] sm:$0xff]
      %v123 = vld [vmem:[%s2] sm:$0xff]
      %v124 = vld [vmem:[%s2 + $0x8] sm:$0xff]
      %126 = vset.pattern.permute.xlu0 0
      %127 = vperm.xlu0 %126, %v123
      %v128 = vpop.permute.xlu0 %127
      %131 = vset.pattern.permute.xlu0 0
      %132 = vperm.xlu0 %131, %v124
      %v133 = vpop.permute.xlu0 %132
      %v135 = vadd.f32 %v121, %v128
      %v136 = vadd.f32 %v122, %v133
      %v137 = vpack.c.bf16 %v136, %v135
      %v139 = vunpack.c.l.b16 %v137
      %v140 = vunpack.c.h.b16 %v137
      %v141 = vpack.c.b16 %v139, %v139
      %v142 = vpack.c.b16 %v140, %v140
      %145 = vst [vmem:[#allocation6] sm:$0xf] %v141
      %146 = vst [vmem:[#allocation6 + $0x4] sm:$0xf] %v142
    $region25: #{tpu_custom_call.1} parent=1 // pred_fallthru
      _
    // Predicated region
    $region26: #{tpu_custom_call.1} parent=1 // pred_check
      _
    $region27: #{tpu_custom_call.1} parent=1 // pred_check_branch
      %148 = sbr.rel (0) target = $region29
    $region28: #{tpu_custom_call.1} parent=1 // pred_region
      %s150 = ssub.s32 128, 128
      %151 = vsyncadd [#allocation5], %s150
      %s152 = sshll.u32 [#allocation6], 4
      %s153 = int_to_ptr.vmem [resolvable:$true] %s152
      %158 = dma.vmem_to_hbm [thread:$0]  %s153, 128, %s3, [#allocation5], 64, 64, 4
    $region29: #{tpu_custom_call.1} parent=1 // pred_fallthru
      _
    // Predicated region
    $region30: #{tpu_custom_call.1} parent=1 // pred_check
      _
    $region31: #{tpu_custom_call.1} parent=1 // pred_check_branch
      %160 = sbr.rel (0) target = $region33
    $region32: #{tpu_custom_call.1} parent=1 // pred_region
      %161 = dma.done [#allocation5], 128
    $region33: #{tpu_custom_call.1} parent=1 // pred_fallthru
      _
    %162 = vsyncpa [#allocation4], 1
    %163 = vsyncpa [#allocation5], 1

</llo_original>
